<compile_context>
chip_gen: v6e
topology: v6e:2x2x1
jax: 0.10.0
libtpu: 0.0.40
codegen_flags: <defaults>
</compile_context>

<pallas_src>
import functools

import jax
import jax.numpy as jnp
from jax import lax
from jax.experimental import pallas as pl
from jax.experimental.pallas import tpu as pltpu

LN_EPS = 1e-5  # torch.nn.LayerNorm default


def _round_up(x, m):
    return ((x + m - 1) // m) * m


def _device_kind():
    try:
        return jax.devices()[0].device_kind.lower()
    except Exception:
        return ""


def _is_v5e(kind):
    return ("v5e" in kind) or ("v5 lite" in kind) or ("v5litepod" in kind)


def _default_vmem_limit_bytes(kind):
    if "v7" in kind:
        return 56 * 1024 * 1024       # v7x: 64 MiB physical VMEM per TensorCore
    if ("v6" in kind) or _is_v5e(kind):
        return 100 * 1024 * 1024      # v5e / v6e: 128 MiB physical VMEM
    return None                        # unknown generation: keep compiler default


def pack_params(params, matmul_dtype=jnp.bfloat16):
    """One-time packing of ContrastiveHead params for the kernel.

    params = (w1, b1, gamma, beta, w2, b2); w1: [d_in, d_in], w2: [d_in, d_out]
    stored input-major so the kernel computes x @ W (== torch's x @ W.T).
    Do this ONCE and reuse -- per-call repacking re-reads+rewrites every weight
    in HBM before the kernel even starts.
    """
    w1, b1, gamma, beta, w2, b2 = params
    return dict(
        w1=jnp.asarray(w1, matmul_dtype),                      # (d_in, d_in)
        w2=jnp.asarray(w2, matmul_dtype),                      # (d_in, d_out)
        ln=jnp.stack([b1, gamma, beta]).astype(jnp.float32),   # (3, d_in)
        b2=jnp.asarray(b2, jnp.float32).reshape(1, -1),        # (1, d_out)
    )


def _head_kernel(x_ref, w1_ref, ln_ref, w2_ref, b2_ref, o_ref, acc_ref, *, d_in):
    # x_ref:   (1, ts, tk)     activation tile (original dtype; cast in-kernel)
    # w1_ref:  (tk, d_in)      linear1 weight K-slice (matmul dtype)
    # ln_ref:  (3, d_in) f32   rows = [b1, gamma, beta]
    # w2_ref:  (d_in, d_out)   linear2 weight (matmul dtype)
    # b2_ref:  (1, d_out) f32
    # o_ref:   (1, ts, d_out)  output tile
    # acc_ref: (ts, d_in) f32  linear1 accumulator (scratch)
    k = pl.program_id(2)

    xb = x_ref[0]
    if xb.dtype != w1_ref.dtype:
        xb = xb.astype(w1_ref.dtype)   # f32->bf16 cast hides under the MXU
    contrib = jnp.dot(xb, w1_ref[...], preferred_element_type=jnp.float32)

    @pl.when(k == 0)
    def _():
        acc_ref[...] = contrib

    @pl.when(k > 0)
    def _():
        acc_ref[...] += contrib

    @pl.when(k == pl.num_programs(2) - 1)
    def _():
        ln = ln_ref[...]
        b1, gamma, beta = ln[0:1, :], ln[1:2, :], ln[2:3, :]
        h = acc_ref[...] + b1                                   # f32, (ts, d_in)
        inv_n = 1.0 / d_in
        mu = jnp.sum(h, axis=-1, keepdims=True) * inv_n
        diff = h - mu
        var = jnp.sum(diff * diff, axis=-1, keepdims=True) * inv_n
        hn = diff * lax.rsqrt(var + LN_EPS) * gamma + beta      # LayerNorm
        hn = jnp.maximum(hn, 0.0)                               # ReLU
        out = jnp.dot(hn.astype(w2_ref.dtype), w2_ref[...],
                      preferred_element_type=jnp.float32)
        o_ref[0] = (out + b2_ref[...]).astype(o_ref.dtype)


def _choose_tiles(B, S_eff, d_in, d_out, x_isz, out_isz, w_isz,
                  vmem_limit_bytes, max_rows_per_tile, k_tile,
                  single_buffer_weights, x_buffer_count):
    budget = int((vmem_limit_bytes or 48 * 1024 * 1024) * 0.85)
    w1_bufs = 1 if single_buffer_weights else 2

    # --- K tiling: stream W1 along K iff a resident W1 would dominate VMEM ---
    tk = d_in
    if k_tile is not None:
        if d_in % k_tile == 0:
            tk = k_tile
    elif w1_bufs * d_in * d_in * w_isz > budget // 2:
        for cand in (512, 256, 128):
            if d_in % cand == 0:
                tk = cand
                break
        # TODO(synk): a large d_in that is not a multiple of 128 keeps W1
        # resident (streaming it would re-introduce lane padding of x / W1).

    # --- row tile: fill the remaining budget, capped for megacore occupancy ---
    x_bufs = x_buffer_count or 2
    fixed = (2 if tk != d_in else w1_bufs) * tk * d_in * w_isz      # W1 buffers
    fixed += (1 if single_buffer_weights else 2) * d_in * d_out * w_isz  # W2
    fixed += 2 * (3 * d_in + d_out) * 4                             # ln vecs, b2
    per_row = (x_bufs * tk * x_isz           # x buffers
               + 2 * d_out * out_isz         # output buffers
               + 4 * d_in                    # f32 accumulator scratch
               + 2 * 4 * d_in)               # f32 LayerNorm temporaries
    ts = max(8, (budget - fixed) // max(per_row, 1))
    ts = min(ts, max_rows_per_tile)
    # keep the seq block inside the array when S_eff >= 8 (standard ragged tail only)
    ts = min(ts, max(8, (S_eff // 8) * 8))
    # keep >= ~4 parallel blocks so both v7x TensorCores / the pipeline stay busy
    want_s_blocks = max(1, -(-4 // B))
    ts = min(ts, max(8, _round_up(-(-S_eff // want_s_blocks), 8)))
    ts = max(8, (ts // 8) * 8)
    return ts, tk


def contrastive_head(x, params, *, cls=True, out_dtype=None,
                     matmul_dtype=jnp.bfloat16, max_rows_per_tile=512,
                     k_tile=None, vmem_limit_bytes=None,
                     single_buffer_weights=False, x_buffer_count=None):
    """ContrastiveHead forward.

    x: [B, S, d_in]; params: output of pack_params() (preferred) or the raw
    (w1, b1, gamma, beta, w2, b2) tuple (packed on the fly -- pre-pack for
    production).  Returns [B, S-1 (if cls) else S, d_out] in out_dtype
    (default x.dtype; pass jnp.bfloat16 to halve output HBM writeback).
    single_buffer_weights=True uses pl.Buffered(1) on the grid-invariant
    weights (halves their VMEM; requires a JAX build that lowers 1-deep
    pipelining) -- left off by default for portability.
    """
    if isinstance(params, (tuple, list)):
        params = pack_params(params, matmul_dtype)
    w1, w2, ln, b2 = params["w1"], params["w2"], params["ln"], params["b2"]

    B, S, d_in = x.shape
    d_out = w2.shape[1]
    S_eff = S - 1 if cls else S
    if S_eff <= 0:
        raise ValueError("need at least one non-cls token")
    out_dtype = out_dtype or x.dtype

    kind = _device_kind()
    if vmem_limit_bytes is None:
        vmem_limit_bytes = _default_vmem_limit_bytes(kind)
    if x_buffer_count is None and _is_v5e(kind):
        # v5e: slowest HBM + longest (no-bf16-VPU) epilogue -> deeper x pipeline.
        x_buffer_count = 3

    ts, tk = _choose_tiles(
        B, S_eff, d_in, d_out,
        jnp.dtype(x.dtype).itemsize, jnp.dtype(out_dtype).itemsize,
        jnp.dtype(w1.dtype).itemsize,
        vmem_limit_bytes, max_rows_per_tile, k_tile,
        single_buffer_weights, x_buffer_count)
    n_s = -(-S_eff // ts)
    n_k = d_in // tk
    grid = (B, n_s, n_k)

    def _spec(shape, index_map, bufs=None):
        if bufs is None:
            return pl.BlockSpec(shape, index_map)
        return pl.BlockSpec(shape, index_map, pipeline_mode=pl.Buffered(bufs))

    w_bufs = 1 if single_buffer_weights else None
    in_specs = [
        _spec((1, ts, tk), lambda b, j, k: (b, j, k), x_buffer_count),
        # W1: K-sliced when streaming (n_k > 1), otherwise grid-invariant.
        _spec((tk, d_in), lambda b, j, k: (k, 0), w_bufs if n_k == 1 else None),
        _spec((3, d_in), lambda b, j, k: (0, 0)),
        _spec((d_in, d_out), lambda b, j, k: (0, 0), w_bufs),
        _spec((1, d_out), lambda b, j, k: (0, 0)),
    ]
    out_spec = pl.BlockSpec((1, ts, d_out), lambda b, j, k: (b, j, 0))

    n_tok = B * S_eff
    cost = pl.CostEstimate(
        flops=2 * n_tok * (d_in * d_in + d_in * d_out),
        transcendentals=n_tok,
        bytes_accessed=(n_tok * d_in * jnp.dtype(x.dtype).itemsize
                        + d_in * d_in * jnp.dtype(w1.dtype).itemsize
                        + d_in * d_out * jnp.dtype(w2.dtype).itemsize
                        + n_tok * d_out * jnp.dtype(out_dtype).itemsize),
    )

    kernel = functools.partial(_head_kernel, d_in=d_in)
    return pl.pallas_call(
        kernel,
        out_shape=jax.ShapeDtypeStruct((B, S_eff, d_out), out_dtype),
        grid_spec=pltpu.PrefetchScalarGridSpec(
            num_scalar_prefetch=0,
            grid=grid,
            in_specs=in_specs,
            out_specs=out_spec,
            scratch_shapes=[pltpu.VMEM((ts, d_in), jnp.float32)],
        ),
        compiler_params=pltpu.CompilerParams(
            dimension_semantics=("parallel", "parallel", "arbitrary"),
            vmem_limit_bytes=vmem_limit_bytes),
        cost_estimate=cost,
    )(x, w1, ln, w2, b2)


def init_params(key, d_in, d_out):
    """torch defaults: Linear U(-1/sqrt(fan_in), +), LayerNorm gamma=1, beta=0.
    Weights are stored [in, out] so kernel/reference compute x @ W."""
    k1, k2, k3, k4 = jax.random.split(key, 4)
    s = 1.0 / jnp.sqrt(d_in)
    w1 = jax.random.uniform(k1, (d_in, d_in), jnp.float32, -s, s)
    b1 = jax.random.uniform(k2, (d_in,), jnp.float32, -s, s)
    gamma = jnp.ones((d_in,), jnp.float32)
    beta = jnp.zeros((d_in,), jnp.float32)
    w2 = jax.random.uniform(k3, (d_in, d_out), jnp.float32, -s, s)
    b2 = jax.random.uniform(k4, (d_out,), jnp.float32, -s, s)
    return (w1, b1, gamma, beta, w2, b2)


def _reference(x, params, cls=True):
    # Pure-f32 reference mirroring the PyTorch module:
    # linear1 -> LayerNorm(eps=1e-5, biased var) -> ReLU -> linear2.
    w1, b1, gamma, beta, w2, b2 = params
    if cls:
        x = x[:, :-1]
    h = jnp.dot(x, w1, precision=lax.Precision.HIGHEST) + b1
    mu = h.mean(-1, keepdims=True)
    var = ((h - mu) ** 2).mean(-1, keepdims=True)
    h = (h - mu) * lax.rsqrt(var + LN_EPS) * gamma + beta
    h = jnp.maximum(h, 0.0)
    return jnp.dot(h, w2, precision=lax.Precision.HIGHEST) + b2


if __name__ == "__main__":
    key = jax.random.PRNGKey(0)
    k1, k2, k3, k4 = jax.random.split(key, 4)

    # Case 1: small shapes consistent with the module (cls token dropped).
    B, S, d_in, d_out = 2, 9, 32, 16
    x = jax.random.normal(k1, (B, S, d_in), jnp.float32)
    params = init_params(k2, d_in, d_out)
    ref = _reference(x, params, cls=True)

    # f32 matmul path (closest to the pure-f32 PyTorch module numerics).
    out_f32 = jax.block_until_ready(
        contrastive_head(x, pack_params(params, jnp.float32), cls=True))
    assert out_f32.shape == (B, S - 1, d_out)
    err = float(jnp.max(jnp.abs(out_f32 - ref)))
    assert jnp.allclose(out_f32, ref, atol=2e-2, rtol=2e-2), err

    # bf16 matmul path (default packing; f32 accumulation + f32 LayerNorm).
    packed = pack_params(params)
    out_bf16 = jax.block_until_ready(contrastive_head(x, packed, cls=True))
    assert out_bf16.shape == (B, S - 1, d_out)
    err = float(jnp.max(jnp.abs(out_bf16 - ref)))
    assert jnp.allclose(out_bf16, ref, atol=5e-2, rtol=5e-2), err

    # Case 2: K-tiled linear1 (streamed W1), multi-block seq grid and a ragged
    # seq tail (exercises partial last blocks with dropped OOB output rows).
    B2, S2, d_in2, d_out2 = 2, 21, 256, 64
    x2 = jax.random.normal(k3, (B2, S2, d_in2), jnp.float32)
    params2 = init_params(k4, d_in2, d_out2)
    ref2 = _reference(x2, params2, cls=True)
    out2 = jax.block_until_ready(
        contrastive_head(x2, pack_params(params2), cls=True,
                         k_tile=128, max_rows_per_tile=16))
    assert out2.shape == (B2, S2 - 1, d_out2)
    err2 = float(jnp.max(jnp.abs(out2 - ref2)))
    assert jnp.allclose(out2, ref2, atol=7e-2, rtol=7e-2), err2

    print("KERNEL_OK")
</pallas_src>

<mosaic_0001>
module attributes {stable_mosaic.version = 11 : i64} {
  func.func @_head_kernel(%arg0: i32, %arg1: i32, %arg2: i32, %arg3: memref<1x8x32xf32, #tpu.memory_space<vmem>>, %arg4: memref<32x32xf32, #tpu.memory_space<vmem>>, %arg5: memref<3x32xf32, #tpu.memory_space<vmem>>, %arg6: memref<32x16xf32, #tpu.memory_space<vmem>>, %arg7: memref<1x16xf32, #tpu.memory_space<vmem>>, %arg8: memref<1x8x16xf32, #tpu.memory_space<vmem>>, %arg9: memref<8x32xf32, #tpu.memory_space<vmem>>) attributes {dimension_semantics = [#tpu.dimension_semantics<parallel>, #tpu.dimension_semantics<parallel>, #tpu.dimension_semantics<arbitrary>], iteration_bounds = array<i64: 2, 1, 1>, scalar_prefetch = 0 : i64, scratch_operands = 1 : i64, tpu.core_type = #tpu.core_type<tc>, window_params = [{transform_indices = @transform_0, window_bounds = array<i64: 1, 8, 32>}, {transform_indices = @transform_1, window_bounds = array<i64: 32, 32>}, {pipeline_mode = #tpu.pipeline_mode<synchronous>, transform_indices = @transform_2, window_bounds = array<i64: 3, 32>}, {pipeline_mode = #tpu.pipeline_mode<synchronous>, transform_indices = @transform_3, window_bounds = array<i64: 32, 16>}, {pipeline_mode = #tpu.pipeline_mode<synchronous>, transform_indices = @transform_4, window_bounds = array<i64: 1, 16>}, {transform_indices = @transform_5, window_bounds = array<i64: 1, 8, 16>}]} {
    %c0 = arith.constant 0 : index
    %c0_0 = arith.constant 0 : index
    %c0_1 = arith.constant 0 : index
    %0 = vector.load %arg3[%c0, %c0_0, %c0_1] : memref<1x8x32xf32, #tpu.memory_space<vmem>>, vector<1x8x32xf32>
    %1 = vector.shape_cast %0 : vector<1x8x32xf32> to vector<8x32xf32>
    %c0_2 = arith.constant 0 : index
    %c0_3 = arith.constant 0 : index
    %2 = vector.load %arg4[%c0_2, %c0_3] : memref<32x32xf32, #tpu.memory_space<vmem>>, vector<32x32xf32>
    %cst = arith.constant dense<0.000000e+00> : vector<8x32xf32>
    %3 = tpu.matmul %1, %2, %cst {dimension_numbers = #tpu.dot_dimension_numbers<[1], [0], [0], [1], [0, 0, 1, 1], [], []>} : vector<8x32xf32>, vector<32x32xf32>, vector<8x32xf32> -> vector<8x32xf32>
    %c0_i32 = arith.constant 0 : i32
    %4 = arith.cmpi eq, %arg2, %c0_i32 : i32
    %5 = arith.extui %4 : i1 to i32
    %c0_i32_4 = arith.constant 0 : i32
    %6 = arith.cmpi ne, %5, %c0_i32_4 : i32
    scf.if %6 {
      %c0_9 = arith.constant 0 : index
      %c0_10 = arith.constant 0 : index
      %13 = vector.load %arg9[%c0_9, %c0_10] : memref<8x32xf32, #tpu.memory_space<vmem>>, vector<8x32xf32>
      tpu.vector_store %arg9[%c0_9, %c0_10], %3 {strides = array<i32>} : memref<8x32xf32, #tpu.memory_space<vmem>>, vector<8x32xf32>,
    } else {
    }
    %c0_i32_5 = arith.constant 0 : i32
    %7 = arith.cmpi sgt, %arg2, %c0_i32_5 : i32
    %8 = arith.extui %7 : i1 to i32
    %c0_i32_6 = arith.constant 0 : i32
    %9 = arith.cmpi ne, %8, %c0_i32_6 : i32
    scf.if %9 {
      %c0_9 = arith.constant 0 : index
      %c0_10 = arith.constant 0 : index
      %13 = vector.load %arg9[%c0_9, %c0_10] : memref<8x32xf32, #tpu.memory_space<vmem>>, vector<8x32xf32>
      %14 = arith.addf %13, %3 : vector<8x32xf32>
      %c0_11 = arith.constant 0 : index
      %c0_12 = arith.constant 0 : index
      %15 = vector.load %arg9[%c0_11, %c0_12] : memref<8x32xf32, #tpu.memory_space<vmem>>, vector<8x32xf32>
      tpu.vector_store %arg9[%c0_11, %c0_12], %14 {strides = array<i32>} : memref<8x32xf32, #tpu.memory_space<vmem>>, vector<8x32xf32>,
    } else {
    }
    %c0_i32_7 = arith.constant 0 : i32
    %10 = arith.cmpi eq, %arg2, %c0_i32_7 : i32
    %11 = arith.extui %10 : i1 to i32
    %c0_i32_8 = arith.constant 0 : i32
    %12 = arith.cmpi ne, %11, %c0_i32_8 : i32
    scf.if %12 {
      %c0_9 = arith.constant 0 : index
      %c0_10 = arith.constant 0 : index
      %13 = vector.load %arg5[%c0_9, %c0_10] : memref<3x32xf32, #tpu.memory_space<vmem>>, vector<3x32xf32>
      %14 = vector.extract_strided_slice %13 {offsets = [0, 0], sizes = [1, 32], strides = [1, 1]} : vector<3x32xf32> to vector<1x32xf32>
      %15 = vector.extract_strided_slice %13 {offsets = [1, 0], sizes = [1, 32], strides = [1, 1]} : vector<3x32xf32> to vector<1x32xf32>
      %16 = vector.extract_strided_slice %13 {offsets = [2, 0], sizes = [1, 32], strides = [1, 1]} : vector<3x32xf32> to vector<1x32xf32>
      %c0_11 = arith.constant 0 : index
      %c0_12 = arith.constant 0 : index
      %17 = vector.load %arg9[%c0_11, %c0_12] : memref<8x32xf32, #tpu.memory_space<vmem>>, vector<8x32xf32>
      %18 = vector.broadcast %14 : vector<1x32xf32> to vector<8x32xf32>
      %19 = arith.addf %17, %18 : vector<8x32xf32>
      %cst_13 = arith.constant dense<0.000000e+00> : vector<8xf32>
      %20 = vector.multi_reduction <add>, %19, %cst_13 [1] : vector<8x32xf32> to vector<8xf32>
      %21 = vector.shape_cast %20 : vector<8xf32> to vector<8x1xf32>
      %cst_14 = arith.constant 3.125000e-02 : f32
      %22 = vector.broadcast %cst_14 : f32 to vector<8x1xf32>
      %23 = arith.mulf %21, %22 : vector<8x1xf32>
      %24 = vector.broadcast %23 : vector<8x1xf32> to vector<8x32xf32>
      %25 = arith.subf %19, %24 : vector<8x32xf32>
      %26 = arith.mulf %25, %25 : vector<8x32xf32>
      %cst_15 = arith.constant dense<0.000000e+00> : vector<8xf32>
      %27 = vector.multi_reduction <add>, %26, %cst_15 [1] : vector<8x32xf32> to vector<8xf32>
      %28 = vector.shape_cast %27 : vector<8xf32> to vector<8x1xf32>
      %cst_16 = arith.constant 3.125000e-02 : f32
      %29 = vector.broadcast %cst_16 : f32 to vector<8x1xf32>
      %30 = arith.mulf %28, %29 : vector<8x1xf32>
      %cst_17 = arith.constant 9.99999974E-6 : f32
      %31 = vector.broadcast %cst_17 : f32 to vector<8x1xf32>
      %32 = arith.addf %30, %31 : vector<8x1xf32>
      %33 = math.rsqrt %32 : vector<8x1xf32>
      %34 = vector.broadcast %33 : vector<8x1xf32> to vector<8x32xf32>
      %35 = arith.mulf %25, %34 : vector<8x32xf32>
      %36 = vector.broadcast %15 : vector<1x32xf32> to vector<8x32xf32>
      %37 = arith.mulf %35, %36 : vector<8x32xf32>
      %38 = vector.broadcast %16 : vector<1x32xf32> to vector<8x32xf32>
      %39 = arith.addf %37, %38 : vector<8x32xf32>
      %cst_18 = arith.constant 0.000000e+00 : f32
      %40 = vector.broadcast %cst_18 : f32 to vector<8x32xf32>
      %41 = arith.maximumf %39, %40 : vector<8x32xf32>
      %c0_19 = arith.constant 0 : index
      %c0_20 = arith.constant 0 : index
      %42 = vector.load %arg6[%c0_19, %c0_20] : memref<32x16xf32, #tpu.memory_space<vmem>>, vector<32x16xf32>
      %cst_21 = arith.constant dense<0.000000e+00> : vector<8x16xf32>
      %43 = tpu.matmul %41, %42, %cst_21 {dimension_numbers = #tpu.dot_dimension_numbers<[1], [0], [0], [1], [0, 0, 1, 1], [], []>} : vector<8x32xf32>, vector<32x16xf32>, vector<8x16xf32> -> vector<8x16xf32>
      %c0_22 = arith.constant 0 : index
      %c0_23 = arith.constant 0 : index
      %44 = vector.load %arg7[%c0_22, %c0_23] : memref<1x16xf32, #tpu.memory_space<vmem>>, vector<1x16xf32>
      %45 = vector.broadcast %44 : vector<1x16xf32> to vector<8x16xf32>
      %46 = arith.addf %43, %45 : vector<8x16xf32>
      %c0_24 = arith.constant 0 : index
      %c0_25 = arith.constant 0 : index
      %c0_26 = arith.constant 0 : index
      %47 = vector.load %arg8[%c0_24, %c0_25, %c0_26] : memref<1x8x16xf32, #tpu.memory_space<vmem>>, vector<1x8x16xf32>
      %48 = vector.shape_cast %47 : vector<1x8x16xf32> to vector<8x16xf32>
      %49 = vector.shape_cast %46 : vector<8x16xf32> to vector<1x8x16xf32>
      tpu.vector_store %arg8[%c0_24, %c0_25, %c0_26], %49 {strides = array<i32>} : memref<1x8x16xf32, #tpu.memory_space<vmem>>, vector<1x8x16xf32>,
    } else {
    }
    return
  }
  func.func @transform_0(%arg0: i32, %arg1: i32, %arg2: i32) -> (i32, i32, i32) {
    %c0_i32 = arith.constant 0 : i32
    return %arg0, %arg1, %arg2 : i32, i32, i32
  }
  func.func @transform_1(%arg0: i32, %arg1: i32, %arg2: i32) -> (i32, i32) {
    %c0_i32 = arith.constant 0 : i32
    %c0_i32_0 = arith.constant 0 : i32
    return %arg2, %c0_i32 : i32, i32
  }
  func.func @transform_2(%arg0: i32, %arg1: i32, %arg2: i32) -> (i32, i32) {
    %c0_i32 = arith.constant 0 : i32
    %c0_i32_0 = arith.constant 0 : i32
    %c0_i32_1 = arith.constant 0 : i32
    return %c0_i32, %c0_i32_0 : i32, i32
  }
  func.func @transform_3(%arg0: i32, %arg1: i32, %arg2: i32) -> (i32, i32) {
    %c0_i32 = arith.constant 0 : i32
    %c0_i32_0 = arith.constant 0 : i32
    %c0_i32_1 = arith.constant 0 : i32
    return %c0_i32, %c0_i32_0 : i32, i32
  }
  func.func @transform_4(%arg0: i32, %arg1: i32, %arg2: i32) -> (i32, i32) {
    %c0_i32 = arith.constant 0 : i32
    %c0_i32_0 = arith.constant 0 : i32
    %c0_i32_1 = arith.constant 0 : i32
    return %c0_i32, %c0_i32_0 : i32, i32
  }
  func.func @transform_5(%arg0: i32, %arg1: i32, %arg2: i32) -> (i32, i32, i32) {
    %c0_i32 = arith.constant 0 : i32
    %c0_i32_0 = arith.constant 0 : i32
    return %arg0, %arg1, %c0_i32 : i32, i32, i32
  }
}

</mosaic_0001>

<llo_original>
// kernel: tpu_custom_call.1
$region0: #{tpu_custom_call.1}
  #allocation0 [shape = 'u32[]', space=smem, size = 0x4, offset = 0x4, fixed_abs, tag = 'smem constant byte address 0x4 - core index']
  #allocation1 [shape = 'u32[144,128]{1,0:T(1,128)}', space=vmem, size = 0x12000, scoped, tag = 'internal scratch']
  #allocation2 [shape = 'f32[8,32]{1,0:T(8,128)}', space=vmem, size = 0x1000, scoped, tag = 'scratch operand']
  %s0 = inlined_call_operand.vmem [shape: f32[2,9,32], index: 0, kind: input, shape index: {}]
  %s1 = inlined_call_operand.vmem [shape: f32[32,32], index: 1, kind: input, shape index: {}]
  %s2 = inlined_call_operand.vmem [shape: f32[3,32], index: 2, kind: input, shape index: {}]
  %s3 = inlined_call_operand.vmem [shape: f32[32,16], index: 3, kind: input, shape index: {}]
  %s4 = inlined_call_operand.vmem [shape: f32[1,16], index: 4, kind: input, shape index: {}]
  %s5 = inlined_call_operand.hbm [shape: f32[2,8,16], index: 5, kind: output, shape index: {}]
  %s6 = sld [smem:[#allocation0]]
  $region65: #{tpu_custom_call.1} parent=0
    _
  %s8 = ssub.s32 1, %s6
  %s9 = scalar_select 0, %s8, %s6
  $region1: #{tpu_custom_call.1} parent=0
    #allocation3 [shape = 'u8[8192]{0}', space=vmem, size = 0x2000, scoped, tag = 'output window, operand 0']
    #allocation4 [shape = 's32[2]{0}', space=sflag, size = 0x8, scoped, tag = 'scoped memory for tpu_custom_call.1']
    %10 = vsyncpa [#allocation4], 0
    %s11 = scalar_lea.sflag [#allocation4], 1
    %12 = vsyncpa %s11, 0
    loop: start=0, step=1, limit=4
    $region2: #{tpu_custom_call.1} parent=1 // loop_pre_header
      _
    $region3: #{tpu_custom_call.1} parent=1 // loop_header
      %s14 = sphi 0, %s18
      %p15 = scmp.ge.s32.totalorder %s14, 4
      %s21 = sphi 0, %s40
      %s22 = sphi 0, %s36
      %s23 = sphi 0, %s32
      %s24 = sphi 0, %s21
      %s25 = sphi 0, %s22
      %s26 = sphi 0, %s23
      %s27 = sphi 0, %s24
      %s28 = sphi 0, %s25
      %s29 = sphi 0, %s26
      %s47 = sphi 0, %s49
      %s50 = sphi 0, %s47
      %s51 = sphi 0, %s50
      %s67 = sphi 0, %s51
      %s73 = sphi 0, %s75
      %s76 = sphi 0, %s73
      %s77 = sphi 0, %s76
      %s93 = sphi 0, %s77
      %s97 = sphi 0, %s97
      %s99 = sphi 0, %s97
      %s100 = sphi 0, %s99
      %s114 = sphi 0, %s100
      %s118 = sphi 0, %s118
      %s120 = sphi 0, %s118
      %s121 = sphi 0, %s120
      %s135 = sphi 0, %s121
      %s139 = sphi 0, %s139
      %s141 = sphi 0, %s139
      %s142 = sphi 0, %s141
      %s156 = sphi 0, %s142
      %s164 = sphi 0, %s166
      %s167 = sphi 0, %s164
      %s168 = sphi 0, %s167
      %s184 = sphi 0, %s168
    $region4: #{tpu_custom_call.1} parent=1 // loop_header_branch
      %17 = sbr.rel (%p15) target = $region8
    $region5: #{tpu_custom_call.1} parent=1 // loop_body
      %s19 = ssub.s32 %s14, 1
      %s20 = ssub.s32 %s14, 2
      %s30 = sadd.s32 1, %s23
      %p31 = scmp.ge.s32.totalorder %s30, 1
      %s32 = scalar_select %p31, 0, %s30
      %s33 = sadd.s32 1, %s22
      %s34 = scalar_select %p31, %s33, %s22
      %p35 = scmp.ge.s32.totalorder %s34, 1
      %s36 = scalar_select %p35, 0, %s34
      %s37 = sadd.s32 1, %s21
      %s38 = scalar_select %p35, %s37, %s21
      %p39 = scmp.ge.s32.totalorder %s38, 2
      %s40 = scalar_select %p39, 0, %s38
      %s41 = ssub.s32 %s21, %s40
      %s42 = ssub.s32 %s22, %s36
      %s43 = sor.u32 %s41, %s42
      %s44 = ssub.s32 %s23, %s32
      %s45 = sor.u32 %s43, %s44
      %p46 = scmp.eq.s32.totalorder %s45, 0
      %s48 = sadd.s32 %s47, 1
      %s49 = scalar_select %p46, %s47, %s48
      %p52 = pneg %p46
      %p53 = scmp.eq.s32.totalorder %s14, 1
      %p54 = por %p52, %p53
      %p55 = scmp.ne.s32.totalorder %s47, %s50
      %p56 = scmp.eq.s32.totalorder %s14, 0
      %p57 = por %p55, %p56
      %p58 = scmp.ne.s32.totalorder %s47, %s50
      %p59 = scmp.eq.s32.totalorder %s19, 1
      %p60 = por %p58, %p59
      %p61 = scmp.ne.s32.totalorder %s50, %s51
      %p62 = scmp.eq.s32.totalorder %s19, 0
      %p63 = por %p61, %p62
      %p64 = scmp.ne.s32.totalorder %s50, %s51
      %p65 = scmp.eq.s32.totalorder %s20, 1
      %p66 = por %p64, %p65
      %p68 = scmp.ne.s32.totalorder %s51, %s67
      %p69 = scmp.eq.s32.totalorder %s20, 0
      %p70 = por %p68, %p69
      %s71 = ssub.s32 %s23, %s32
      %p72 = scmp.eq.s32.totalorder %s71, 0
      %s74 = sadd.s32 %s73, 1
      %s75 = scalar_select %p72, %s73, %s74
      %p78 = pneg %p72
      %p79 = scmp.eq.s32.totalorder %s14, 1
      %p80 = por %p78, %p79
      %p81 = scmp.ne.s32.totalorder %s73, %s76
      %p82 = scmp.eq.s32.totalorder %s14, 0
      %p83 = por %p81, %p82
      %p84 = scmp.ne.s32.totalorder %s73, %s76
      %p85 = scmp.eq.s32.totalorder %s19, 1
      %p86 = por %p84, %p85
      %p87 = scmp.ne.s32.totalorder %s76, %s77
      %p88 = scmp.eq.s32.totalorder %s19, 0
      %p89 = por %p87, %p88
      %p90 = scmp.ne.s32.totalorder %s76, %s77
      %p91 = scmp.eq.s32.totalorder %s20, 1
      %p92 = por %p90, %p91
      %p94 = scmp.ne.s32.totalorder %s77, %s93
      %p95 = scmp.eq.s32.totalorder %s20, 0
      %p96 = por %p94, %p95
      %s98 = sadd.s32 %s97, 1
      %p101 = scmp.eq.s32.totalorder %s14, 1
      %p102 = scmp.ne.s32.totalorder %s97, %s99
      %p103 = scmp.eq.s32.totalorder %s14, 0
      %p104 = por %p102, %p103
      %p105 = scmp.ne.s32.totalorder %s97, %s99
      %p106 = scmp.eq.s32.totalorder %s19, 1
      %p107 = por %p105, %p106
      %p108 = scmp.ne.s32.totalorder %s99, %s100
      %p109 = scmp.eq.s32.totalorder %s19, 0
      %p110 = por %p108, %p109
      %p111 = scmp.ne.s32.totalorder %s99, %s100
      %p112 = scmp.eq.s32.totalorder %s20, 1
      %p113 = por %p111, %p112
      %p115 = scmp.ne.s32.totalorder %s100, %s114
      %p116 = scmp.eq.s32.totalorder %s20, 0
      %p117 = por %p115, %p116
      %s119 = sadd.s32 %s118, 1
      %p122 = scmp.eq.s32.totalorder %s14, 1
      %p123 = scmp.ne.s32.totalorder %s118, %s120
      %p124 = scmp.eq.s32.totalorder %s14, 0
      %p125 = por %p123, %p124
      %p126 = scmp.ne.s32.totalorder %s118, %s120
      %p127 = scmp.eq.s32.totalorder %s19, 1
      %p128 = por %p126, %p127
      %p129 = scmp.ne.s32.totalorder %s120, %s121
      %p130 = scmp.eq.s32.totalorder %s19, 0
      %p131 = por %p129, %p130
      %p132 = scmp.ne.s32.totalorder %s120, %s121
      %p133 = scmp.eq.s32.totalorder %s20, 1
      %p134 = por %p132, %p133
      %p136 = scmp.ne.s32.totalorder %s121, %s135
      %p137 = scmp.eq.s32.totalorder %s20, 0
      %p138 = por %p136, %p137
      %s140 = sadd.s32 %s139, 1
      %p143 = scmp.eq.s32.totalorder %s14, 1
      %p144 = scmp.ne.s32.totalorder %s139, %s141
      %p145 = scmp.eq.s32.totalorder %s14, 0
      %p146 = por %p144, %p145
      %p147 = scmp.ne.s32.totalorder %s139, %s141
      %p148 = scmp.eq.s32.totalorder %s19, 1
      %p149 = por %p147, %p148
      %p150 = scmp.ne.s32.totalorder %s141, %s142
      %p151 = scmp.eq.s32.totalorder %s19, 0
      %p152 = por %p150, %p151
      %p153 = scmp.ne.s32.totalorder %s141, %s142
      %p154 = scmp.eq.s32.totalorder %s20, 1
      %p155 = por %p153, %p154
      %p157 = scmp.ne.s32.totalorder %s142, %s156
      %p158 = scmp.eq.s32.totalorder %s20, 0
      %p159 = por %p157, %p158
      %s160 = ssub.s32 %s21, %s40
      %s161 = ssub.s32 %s22, %s36
      %s162 = sor.u32 %s160, %s161
      %p163 = scmp.eq.s32.totalorder %s162, 0
      %s165 = sadd.s32 %s164, 1
      %s166 = scalar_select %p163, %s164, %s165
      %p169 = pneg %p163
      %p170 = scmp.eq.s32.totalorder %s14, 1
      %p171 = por %p169, %p170
      %p172 = scmp.ne.s32.totalorder %s164, %s167
      %p173 = scmp.eq.s32.totalorder %s14, 0
      %p174 = por %p172, %p173
      %p175 = scmp.ne.s32.totalorder %s164, %s167
      %p176 = scmp.eq.s32.totalorder %s19, 1
      %p177 = por %p175, %p176
      %p178 = scmp.ne.s32.totalorder %s167, %s168
      %p179 = scmp.eq.s32.totalorder %s19, 0
      %p180 = por %p178, %p179
      %p181 = scmp.ne.s32.totalorder %s167, %s168
      %p182 = scmp.eq.s32.totalorder %s20, 1
      %p183 = por %p181, %p182
      %p185 = scmp.ne.s32.totalorder %s168, %s184
      %p186 = scmp.eq.s32.totalorder %s20, 0
      %p187 = por %p185, %p186
      %p188 = scmp.le.s32.totalorder 1, %s14
      %p189 = scmp.lt.s32.totalorder %s14, 3
      %p190 = pnand %p188, %p189
      %p191 = pneg %p190
      // Predicated region
      $region9: #{tpu_custom_call.1} parent=5 // pred_check
        _
      $region10: #{tpu_custom_call.1} parent=5 // pred_check_branch
        %193 = sbr.rel (%p190) target = $region12
      $region11: #{tpu_custom_call.1} parent=5 // pred_region
        %s194 = ssub.s32 %s14, 1
        // Predicated region
        $region13: #{tpu_custom_call.1} parent=11 // pred_check
          %p195 = pneg %p89
        $region14: #{tpu_custom_call.1} parent=11 // pred_check_branch
          %197 = sbr.rel (%p195) target = $region16
        $region15: #{tpu_custom_call.1} parent=11 // pred_region
          %s198 = smul.u32 4, %s26
          %p199 = scmp.lt.s32.totalorder %s198, 3
          %s200 = scalar_select %p199, %s198, 3
          %s201 = smul.addr %s200, 8
          %s202 = scalar_lea.vmem %s1, %s201
          %s203 = smul.u32 4, %s26
        $region16: #{tpu_custom_call.1} parent=11 // pred_fallthru
          _
        // Predicated region
        $region17: #{tpu_custom_call.1} parent=11 // pred_check
          %p204 = pneg %p110
        $region18: #{tpu_custom_call.1} parent=11 // pred_check_branch
          %206 = sbr.rel (%p204) target = $region20
        $region19: #{tpu_custom_call.1} parent=11 // pred_region
          _
        $region20: #{tpu_custom_call.1} parent=11 // pred_fallthru
          _
        // Predicated region
        $region21: #{tpu_custom_call.1} parent=11 // pred_check
          %p207 = pneg %p131
        $region22: #{tpu_custom_call.1} parent=11 // pred_check_branch
          %209 = sbr.rel (%p207) target = $region24
        $region23: #{tpu_custom_call.1} parent=11 // pred_region
          _
        $region24: #{tpu_custom_call.1} parent=11 // pred_fallthru
          _
        // Predicated region
        $region25: #{tpu_custom_call.1} parent=11 // pred_check
          %p210 = pneg %p152
        $region26: #{tpu_custom_call.1} parent=11 // pred_check_branch
          %212 = sbr.rel (%p210) target = $region28
        $region27: #{tpu_custom_call.1} parent=11 // pred_region
          _
        $region28: #{tpu_custom_call.1} parent=11 // pred_fallthru
          _
      $region12: #{tpu_custom_call.1} parent=5 // pred_fallthru
        _
      %p213 = scmp.lt.s32.totalorder %s14, 2
      // Predicated region
      $region29: #{tpu_custom_call.1} parent=5 // pred_check
        %p214 = pneg %p213
      $region30: #{tpu_custom_call.1} parent=5 // pred_check_branch
        %216 = sbr.rel (%p214) target = $region32
      $region31: #{tpu_custom_call.1} parent=5 // pred_region
        // Predicated region
        $region33: #{tpu_custom_call.1} parent=31 // pred_check
          %p217 = pneg %p57
        $region34: #{tpu_custom_call.1} parent=31 // pred_check_branch
          %219 = sbr.rel (%p217) target = $region36
        $region35: #{tpu_custom_call.1} parent=31 // pred_region
          %p220 = scmp.lt.s32.totalorder %s21, 1
          %s221 = scalar_select %p220, %s21, 1
          %p222 = scmp.lt.s32.totalorder %s22, 1
          %s223 = scalar_select %p222, %s22, 1
          %p224 = scmp.lt.s32.totalorder %s23, 0
          %s225 = scalar_select %p224, %s23, 0
          %s226 = sadd.s32 %s225, %s223
          %s227 = smul.addr %s221, 2
          %s228 = sadd.s32 %s226, %s227
          %s229 = smul.addr %s228, 8
          %s230 = scalar_lea.vmem %s0, %s229
        $region36: #{tpu_custom_call.1} parent=31 // pred_fallthru
          _
      $region32: #{tpu_custom_call.1} parent=5 // pred_fallthru
        _
      %p231 = scmp.le.s32.totalorder 1, %s14
      %p232 = scmp.lt.s32.totalorder %s14, 3
      %p233 = pnand %p231, %p232
      %p234 = pneg %p233
      // Predicated region
      $region37: #{tpu_custom_call.1} parent=5 // pred_check
        _
      $region38: #{tpu_custom_call.1} parent=5 // pred_check_branch
        %236 = sbr.rel (%p233) target = $region40
      $region39: #{tpu_custom_call.1} parent=5 // pred_region
        %s237 = ssub.s32 %s14, 1
        %p238 = scmp.lt.s32.totalorder %s24, 1
        %s239 = scalar_select %p238, %s24, 1
        %p240 = scmp.lt.s32.totalorder %s25, 1
        %s241 = scalar_select %p240, %s25, 1
        %p242 = scmp.lt.s32.totalorder %s26, 0
        %s243 = scalar_select %p242, %s26, 0
        %s244 = sadd.s32 %s243, %s241
        %s245 = smul.addr %s239, 2
        %s246 = sadd.s32 %s244, %s245
        %s247 = smul.addr %s246, 8
        %s248 = scalar_lea.vmem %s0, %s247
        %p249 = pneg %p63
        %p250 = pneg %p60
        %s251 = smul.u32 4, %s26
        %p252 = scmp.lt.s32.totalorder %s251, 3
        %s253 = scalar_select %p252, %s251, 3
        %s254 = smul.addr %s253, 8
        %s255 = scalar_lea.vmem %s1, %s254
        %p256 = pneg %p89
        %p257 = pneg %p86
        %p258 = pneg %p110
        %p259 = pneg %p107
        %p260 = pneg %p131
        %p261 = pneg %p128
        %p262 = pneg %p152
        %p263 = pneg %p149
        %p264 = pneg %p180
        %p265 = pneg %p177
        %s266 = sand.u32 %s167, 1
        %s267 = scalar_lea.sflag [#allocation4], %s266
        %s268 = sand.u32 %s167, 1
        %s269 = smul.addr %s268, 8
        %s270 = scalar_lea.vmem [#allocation3], %s269
        %p271 = scmp.lt.s32.totalorder %s24, 1
        %s272 = scalar_select %p271, %s24, 1
        %p273 = scmp.lt.s32.totalorder %s25, 1
        %s274 = scalar_select %p273, %s25, 1
        %p275 = scmp.lt.s32.totalorder %s26, 0
        %s276 = scalar_select %p275, %s26, 0
        %s277 = sadd.s32 %s276, %s274
        %s278 = smul.addr %s272, 2
        %s279 = sadd.s32 %s277, %s278
        %s280 = smul.addr %s279, 8
        %s281 = scalar_lea.vmem %s0, %s280
        %s282 = smul.u32 4, %s26
        %p283 = scmp.lt.s32.totalorder %s282, 3
        %s284 = scalar_select %p283, %s282, 3
        %s285 = smul.addr %s284, 8
        %s286 = scalar_lea.vmem %s1, %s285
        %s287 = smul.u32 4, %s26
        %v288 = vld [vmem:[%s281] sm:$0xff]
        %v289 = vld [vmem:[%s286] sm:$0xff]
        %v290 = vld [vmem:[%s286 + $0x8] sm:$0xff]
        %v291 = vld [vmem:[%s286 + $0x10] sm:$0xff]
        %v292 = vld [vmem:[%s286 + $0x18] sm:$0xff]
        %vm293 = vcmask 261120
        %v295 = vsel %vm293, %v288, 0
        %297 = vmatprep.subr.mxu0 0.0
        %298 = vmatpush1.msra.mxu0 0.0
        %299 = vmatprep.subr.mxu0 0.0
        %300 = vmatpush1.msra.mxu0 0.0
        %301 = vmatprep.subr.mxu0 0.0
        %302 = vmatpush1.msra.mxu0 0.0
        %303 = vmatprep.subr.mxu0 0.0
        %304 = vmatpush1.msra.mxu0 0.0
        %305 = vmatprep.subr.mxu0 0.0
        %306 = vmatpush1.msra.mxu0 0.0
        %307 = vmatprep.subr.mxu0 0.0
        %308 = vmatpush1.msra.mxu0 0.0
        %309 = vmatprep.subr.mxu0 0.0
        %310 = vmatpush1.msra.mxu0 0.0
        %311 = vmatprep.subr.mxu0 0.0
        %312 = vmatpush1.msra.mxu0 0.0
        %313 = vmatprep.subr.mxu0 0.0
        %314 = vmatpush1.msra.mxu0 0.0
        %315 = vmatprep.subr.mxu0 0.0
        %316 = vmatpush1.msra.mxu0 0.0
        %317 = vmatprep.subr.mxu0 0.0
        %318 = vmatpush1.msra.mxu0 0.0
        %319 = vmatprep.subr.mxu0 0.0
        %320 = vmatpush1.msra.mxu0 0.0
        %321 = vmatprep.subr.mxu0 0.0
        %322 = vmatpush1.msra.mxu0 %v292
        %323 = vmatprep.subr.mxu0 0.0
        %324 = vmatpush1.msra.mxu0 %v291
        %325 = vmatprep.subr.mxu0 0.0
        %326 = vmatpush1.msra.mxu0 %v290
        %327 = vmatprep.subr.mxu0 0.0
        %328 = vmatpush1.msra.mxu0 %v289
        %329 = vmatprep.subr.mxu0 0.0
        %330 = vmatpush2.msra.mxu0 0.0
        %331 = vmatprep.subr.mxu0 0.0
        %332 = vmatpush2.msra.mxu0 0.0
        %333 = vmatprep.subr.mxu0 0.0
        %334 = vmatpush2.msra.mxu0 0.0
        %335 = vmatprep.subr.mxu0 0.0
        %336 = vmatpush2.msra.mxu0 0.0
        %337 = vmatprep.subr.mxu0 0.0
        %338 = vmatpush2.msra.mxu0 0.0
        %339 = vmatprep.subr.mxu0 0.0
        %340 = vmatpush2.msra.mxu0 0.0
        %341 = vmatprep.subr.mxu0 0.0
        %342 = vmatpush2.msra.mxu0 0.0
        %343 = vmatprep.subr.mxu0 0.0
        %344 = vmatpush2.msra.mxu0 0.0
        %345 = vmatprep.subr.mxu0 0.0
        %346 = vmatpush2.msra.mxu0 0.0
        %347 = vmatprep.subr.mxu0 0.0
        %348 = vmatpush2.msra.mxu0 0.0
        %349 = vmatprep.subr.mxu0 0.0
        %350 = vmatpush2.msra.mxu0 0.0
        %351 = vmatprep.subr.mxu0 0.0
        %352 = vmatpush2.msra.mxu0 0.0
        %353 = vmatprep.subr.mxu0 0.0
        %354 = vmatpush2.msra.mxu0 0.0
        %355 = vmatprep.subr.mxu0 0.0
        %356 = vmatpush2.msra.mxu0 0.0
        %357 = vmatprep.subr.mxu0 0.0
        %358 = vmatpush2.msra.mxu0 0.0
        %359 = vmatprep.subr.mxu0 0.0
        %360 = vmatpush2.msra.mxu0 0.0
        %361 = vmatprep.mubr.f32.mxu0 0.0
        %362 = vmatmul.mubr.f32.gmra.mxu0 %v295
        %v363 = vpop.f32.mrf.mxu0
        %v364 = vadd.f32 0.0, %v363
        %v365 = vpop.f32.mrf.mxu0
        %366 = vdwg.mxu0
        %p367 = scmp.eq.s32.totalorder %s26, 0
        // Predicated region
        $region41: #{tpu_custom_call.1} parent=39 // pred_check
          %p368 = pneg %p367
        $region42: #{tpu_custom_call.1} parent=39 // pred_check_branch
          %370 = sbr.rel (%p368) target = $region44
        $region43: #{tpu_custom_call.1} parent=39 // pred_region
          %371 = vst.msk [vmem:[#allocation2] sm:$0xff] %vm293, %v364
        $region44: #{tpu_custom_call.1} parent=39 // pred_fallthru
          _
        %p372 = scmp.gt.s32.totalorder %s26, 0
        // Predicated region
        $region45: #{tpu_custom_call.1} parent=39 // pred_check
          %p373 = pneg %p372
        $region46: #{tpu_custom_call.1} parent=39 // pred_check_branch
          %375 = sbr.rel (%p373) target = $region48
        $region47: #{tpu_custom_call.1} parent=39 // pred_region
          %v376 = vld [vmem:[#allocation2] sm:$0xff]
          %v377 = vadd.f32 %v376, %v364
          %378 = vst.msk [vmem:[#allocation2] sm:$0xff] %vm293, %v377
        $region48: #{tpu_custom_call.1} parent=39 // pred_fallthru
          _
        // Predicated region
        $region49: #{tpu_custom_call.1} parent=39 // pred_check
          %p379 = pneg %p367
        $region50: #{tpu_custom_call.1} parent=39 // pred_check_branch
          %381 = sbr.rel (%p379) target = $region52
        $region51: #{tpu_custom_call.1} parent=39 // pred_region
          %v382 = vld [vmem:[%s2] sm:$0x7]
          %v383 = vld [vmem:[#allocation2] sm:$0xff]
          %v384 = vlaneseq
          %v385 = vshrl.u32 %v384, 7
          %v386 = vsub.s32 0, %v385
          %v387 = vrot.slane %v382, %v386
          %v388 = vadd.f32 %v383, %v387
          %v389 = vsel %vm293, %v388, 0.0
          %390 = vadd.xlane.f32.xlu0 %v389
          %v391 = vpop.xlane.xlu0 %390
          %v392 = vmul.f32 %v391, 0.03125
          %v393 = vsub.f32 %v388, %v392
          %v394 = vmul.f32 %v393, %v393
          %v395 = vsel %vm293, %v394, 0.0
          %396 = vadd.xlane.f32.xlu0 %v395
          %v397 = vpop.xlane.xlu0 %396
          %v398 = vmul.f32 %v397, 0.03125
          %v399 = vadd.f32 %v398, 1e-05
          %v400 = vrsqrt.pop %v399
          %v401 = vmul.f32 %v393, %v400
          %v402 = vlaneseq
          %v403 = vshrl.u32 %v402, 7
          %v404 = vsub.s32 1, %v403
          %v405 = vrot.slane %v382, %v404
          %v406 = vmul.f32 %v401, %v405
          %v407 = vlaneseq
          %v408 = vshrl.u32 %v407, 7
          %v409 = vsub.s32 2, %v408
          %v410 = vrot.slane %v382, %v409
          %v411 = vadd.f32 %v406, %v410
          %v412 = vmax.f32 %v411, 0.0
          %v413 = vld [vmem:[%s3] sm:$0xff]
          %v414 = vld [vmem:[%s3 + $0x8] sm:$0xff]
          %v415 = vld [vmem:[%s3 + $0x10] sm:$0xff]
          %v416 = vld [vmem:[%s3 + $0x18] sm:$0xff]
          %v417 = vld [vmem:[%s4] sm:$0x1]
          %v419 = vlaneseq
          %v420 = vshrl.u32 %v419, 7
          %v421 = vsub.s32 0, %v420
          %v422 = vrot.slane %v417, %v421
          %v425 = vsel %vm293, %v412, 0
          %427 = vmatprep.subr.mxu0 0.0
          %428 = vmatpush1.msra.mxu0 0.0
          %429 = vmatprep.subr.mxu0 0.0
          %430 = vmatpush1.msra.mxu0 0.0
          %431 = vmatprep.subr.mxu0 0.0
          %432 = vmatpush1.msra.mxu0 0.0
          %433 = vmatprep.subr.mxu0 0.0
          %434 = vmatpush1.msra.mxu0 0.0
          %435 = vmatprep.subr.mxu0 0.0
          %436 = vmatpush1.msra.mxu0 0.0
          %437 = vmatprep.subr.mxu0 0.0
          %438 = vmatpush1.msra.mxu0 0.0
          %439 = vmatprep.subr.mxu0 0.0
          %440 = vmatpush1.msra.mxu0 0.0
          %441 = vmatprep.subr.mxu0 0.0
          %442 = vmatpush1.msra.mxu0 0.0
          %443 = vmatprep.subr.mxu0 0.0
          %444 = vmatpush1.msra.mxu0 0.0
          %445 = vmatprep.subr.mxu0 0.0
          %446 = vmatpush1.msra.mxu0 0.0
          %447 = vmatprep.subr.mxu0 0.0
          %448 = vmatpush1.msra.mxu0 0.0
          %449 = vmatprep.subr.mxu0 0.0
          %450 = vmatpush1.msra.mxu0 0.0
          %451 = vmatprep.subr.mxu0 0.0
          %452 = vmatpush1.msra.mxu0 %v416
          %453 = vmatprep.subr.mxu0 0.0
          %454 = vmatpush1.msra.mxu0 %v415
          %455 = vmatprep.subr.mxu0 0.0
          %456 = vmatpush1.msra.mxu0 %v414
          %457 = vmatprep.subr.mxu0 0.0
          %458 = vmatpush1.msra.mxu0 %v413
          %459 = vmatprep.subr.mxu0 0.0
          %460 = vmatpush2.msra.mxu0 0.0
          %461 = vmatprep.subr.mxu0 0.0
          %462 = vmatpush2.msra.mxu0 0.0
          %463 = vmatprep.subr.mxu0 0.0
          %464 = vmatpush2.msra.mxu0 0.0
          %465 = vmatprep.subr.mxu0 0.0
          %466 = vmatpush2.msra.mxu0 0.0
          %467 = vmatprep.subr.mxu0 0.0
          %468 = vmatpush2.msra.mxu0 0.0
          %469 = vmatprep.subr.mxu0 0.0
          %470 = vmatpush2.msra.mxu0 0.0
          %471 = vmatprep.subr.mxu0 0.0
          %472 = vmatpush2.msra.mxu0 0.0
          %473 = vmatprep.subr.mxu0 0.0
          %474 = vmatpush2.msra.mxu0 0.0
          %475 = vmatprep.subr.mxu0 0.0
          %476 = vmatpush2.msra.mxu0 0.0
          %477 = vmatprep.subr.mxu0 0.0
          %478 = vmatpush2.msra.mxu0 0.0
          %479 = vmatprep.subr.mxu0 0.0
          %480 = vmatpush2.msra.mxu0 0.0
          %481 = vmatprep.subr.mxu0 0.0
          %482 = vmatpush2.msra.mxu0 0.0
          %483 = vmatprep.subr.mxu0 0.0
          %484 = vmatpush2.msra.mxu0 0.0
          %485 = vmatprep.subr.mxu0 0.0
          %486 = vmatpush2.msra.mxu0 0.0
          %487 = vmatprep.subr.mxu0 0.0
          %488 = vmatpush2.msra.mxu0 0.0
          %489 = vmatprep.subr.mxu0 0.0
          %490 = vmatpush2.msra.mxu0 0.0
          %491 = vmatprep.mubr.f32.mxu0 0.0
          %492 = vmatmul.mubr.f32.gmra.mxu0 %v425
          %v493 = vpop.f32.mrf.mxu0
          %v494 = vadd.f32 %v422, %v493
          %v495 = vpop.f32.mrf.mxu0
          %496 = vdwg.mxu0
          %vm497 = vcmask 130048
          %498 = vst.msk [vmem:[%s270] sm:$0xff] %vm497, %v494
        $region52: #{tpu_custom_call.1} parent=39 // pred_fallthru
          _
        %s499 = sand.u32 %s167, 1
        %s500 = scalar_lea.sflag [#allocation4], %s499
        %s501 = sand.u32 %s167, 1
        %s502 = smul.addr %s501, 8
        %s503 = scalar_lea.vmem [#allocation3], %s502
        // Predicated region
        $region53: #{tpu_custom_call.1} parent=39 // pred_check
          %p504 = pneg %p177
        $region54: #{tpu_custom_call.1} parent=39 // pred_check_branch
          %506 = sbr.rel (%p504) target = $region56
        $region55: #{tpu_custom_call.1} parent=39 // pred_region
          %s508 = ssub.s32 128, 128
          %509 = vsyncadd %s500, %s508
          %s510 = sadd.s32 %s25, %s24
          %s511 = smul.addr %s510, 128
          %s512 = scalar_lea.hbm %s5, %s511
          %s514 = sshll.u32 %s503, 4
          %s515 = int_to_ptr.vmem [resolvable:$true] %s514
          %517 = dma.vmem_to_hbm [thread:$0]  %s515, 128, %s512, %s500
        $region56: #{tpu_custom_call.1} parent=39 // pred_fallthru
          _
      $region40: #{tpu_custom_call.1} parent=5 // pred_fallthru
        _
      %p518 = scmp.le.s32.totalorder 2, %s14
      // Predicated region
      $region57: #{tpu_custom_call.1} parent=5 // pred_check
        %p519 = pneg %p518
      $region58: #{tpu_custom_call.1} parent=5 // pred_check_branch
        %521 = sbr.rel (%p519) target = $region60
      $region59: #{tpu_custom_call.1} parent=5 // pred_region
        %s522 = ssub.s32 %s14, 2
        // Predicated region
        $region61: #{tpu_custom_call.1} parent=59 // pred_check
          %p523 = pneg %p183
        $region62: #{tpu_custom_call.1} parent=59 // pred_check_branch
          %525 = sbr.rel (%p523) target = $region64
        $region63: #{tpu_custom_call.1} parent=59 // pred_region
          %s526 = sand.u32 %s168, 1
          %s527 = scalar_lea.sflag [#allocation4], %s526
          %s528 = sand.u32 %s168, 1
          %s529 = smul.addr %s528, 8
          %s530 = scalar_lea.vmem [#allocation3], %s529
          %531 = dma.done %s527, 128
        $region64: #{tpu_custom_call.1} parent=59 // pred_fallthru
          _
      $region60: #{tpu_custom_call.1} parent=5 // pred_fallthru
        _
    $region6: #{tpu_custom_call.1} parent=1 // loop_footer
      %s18 = sadd.s32 1, %s14
    $region7: #{tpu_custom_call.1} parent=1 // loop_footer_branch
      %13 = sbr.rel target = $region3
    $region8: #{tpu_custom_call.1} parent=1 // loop_exit
      _
    %532 = vsyncpa [#allocation4], 1
    %s533 = scalar_lea.sflag [#allocation4], 1
    %534 = vsyncpa %s533, 1

</llo_original>
